<compile_context>
chip_gen: v7x
topology: tpu7x:2x2x1
jax: 0.10.0
libtpu: 0.0.40
codegen_flags: <defaults>
</compile_context>

<pallas_src>
import jax
import jax.numpy as jnp
from jax.experimental import pallas as pl
from jax.experimental.pallas import tpu as pltpu

_SUBLANES = 8
_SMALL_OUTPUT_BYTES = 256 * 1024  # below this, plain XLA broadcast wins.


def _mog_kernel(params_ref, out_ref):
    # params_ref: (1, p_len) resident in VMEM (loaded once, never re-DMAed)
    # out_ref:    (TILE_B, p_len) output block
    # Broadcast the param row down the batch axis; the writeback DMA of the
    # previous block overlaps this trivial fill.
    out_ref[...] = jnp.broadcast_to(params_ref[...], out_ref.shape)


def _round_up(x: int, m: int) -> int:
    return ((x + m - 1) // m) * m


def mog_forward(xs: jax.Array, params: jax.Array, *, target_tile_rows: int = 4096,
                force_pallas: bool = False) -> jax.Array:
    """Equivalent of MoG.forward: tile `params` over len(xs) rows."""
    batch = xs.shape[0]
    p_len = params.shape[0]
    itemsize = jnp.dtype(params.dtype).itemsize

    # Small outputs: fixed pallas_call launch/grid overhead dominates; let XLA
    # write the final layout directly.
    if not force_pallas and batch * p_len * itemsize < _SMALL_OUTPUT_BYTES:
        return jnp.broadcast_to(params[None, :], (batch, p_len))

    # Rows per output block: a multiple of 8 (sublane), capped at
    # ~target_tile_rows (~2 MiB lane-padded), and split into >= 2 blocks
    # whenever possible so both v7x TensorCores get work.
    max_tile = max(_SUBLANES, (target_tile_rows // _SUBLANES) * _SUBLANES)
    if batch > max_tile:
        tile_b = max_tile
    else:
        tile_b = max(_SUBLANES, _round_up(pl.cdiv(batch, 2), _SUBLANES))
    grid = pl.cdiv(batch, tile_b)

    return pl.pallas_call(
        _mog_kernel,
        out_shape=jax.ShapeDtypeStruct((batch, p_len), params.dtype),
        grid_spec=pltpu.PrefetchScalarGridSpec(
            num_scalar_prefetch=0,
            grid=(grid,),
            in_specs=[
                # Whole (tiny) params vector resident in VMEM: no per-step DMA,
                # no second pipeline buffer for a constant input.
                pl.BlockSpec(memory_space=pltpu.MemorySpace.VMEM),
            ],
            out_specs=pl.BlockSpec((tile_b, p_len), lambda i: (i, 0)),
        ),
        compiler_params=pltpu.CompilerParams(
            # Disjoint output blocks, no accumulator: safe to shard across TCs.
            dimension_semantics=("parallel",),
        ),
        cost_estimate=pl.CostEstimate(
            flops=0,
            transcendentals=0,
            bytes_accessed=batch * p_len * itemsize + p_len * itemsize,
        ),
    )(params.reshape(1, p_len))


if __name__ == "__main__":
    key = jax.random.PRNGKey(0)
    k_params, k_xs = jax.random.split(key)

    n_comps = 8                      # params has 3 * n_comps = 24 entries
    d = 1                            # toy 1-D data points
    params = jax.random.normal(k_params, (3 * n_comps,), dtype=jnp.float32)

    # Small-shape demo (forces the Pallas path so the kernel is exercised):
    # batch=512 -> tile_b=256, grid=2 (2-TC split path).
    batch = 512
    xs = jax.random.normal(k_xs, (batch, d), dtype=jnp.float32)
    out = jax.block_until_ready(mog_forward(xs, params, force_pallas=True))
    ref = jnp.tile(params[None, :], (batch, 1))
    assert out.shape == (batch, 3 * n_comps), out.shape
    assert jnp.array_equal(out, ref), "mismatch vs reference (small batch)"

    # Multi-block grid with a partial trailing block: cdiv(10000, 4096) = 3.
    batch2 = 10_000
    xs2 = jax.random.normal(k_xs, (batch2, d), dtype=jnp.float32)
    out2 = jax.block_until_ready(mog_forward(xs2, params))
    ref2 = jnp.tile(params[None, :], (batch2, 1))
    assert out2.shape == (batch2, 3 * n_comps), out2.shape
    assert jnp.array_equal(out2, ref2), "mismatch vs reference (multi-block)"

    # Small-output XLA dispatch path (non-Pallas fast path).
    out3 = jax.block_until_ready(mog_forward(xs, params))
    assert jnp.array_equal(out3, ref), "mismatch vs reference (XLA small path)"

    print("KERNEL_OK")
</pallas_src>

<mosaic_0001>
module attributes {stable_mosaic.version = 11 : i64} {
  func.func @_mog_kernel(%arg0: i32, %arg1: memref<1x24xf32, #tpu.memory_space<vmem>>, %arg2: memref<256x24xf32, #tpu.memory_space<vmem>>) attributes {dimension_semantics = [#tpu.dimension_semantics<parallel>], iteration_bounds = array<i64: 2>, scalar_prefetch = 0 : i64, scratch_operands = 0 : i64, tpu.core_type = #tpu.core_type<tc>, window_params = [{pipeline_mode = #tpu.pipeline_mode<synchronous>, transform_indices = @transform_0, window_bounds = array<i64: 1, 24>}, {transform_indices = @transform_1, window_bounds = array<i64: 256, 24>}]} {
    %c0 = arith.constant 0 : index
    %c0_0 = arith.constant 0 : index
    %0 = vector.load %arg1[%c0, %c0_0] : memref<1x24xf32, #tpu.memory_space<vmem>>, vector<1x24xf32>
    %1 = vector.shape_cast %0 : vector<1x24xf32> to vector<1x24xf32>
    %2 = vector.broadcast %1 : vector<1x24xf32> to vector<256x24xf32>
    %c0_1 = arith.constant 0 : index
    %c0_2 = arith.constant 0 : index
    %3 = vector.load %arg2[%c0_1, %c0_2] : memref<256x24xf32, #tpu.memory_space<vmem>>, vector<256x24xf32>
    tpu.vector_store %arg2[%c0_1, %c0_2], %2 {strides = array<i32>} : memref<256x24xf32, #tpu.memory_space<vmem>>, vector<256x24xf32>,
    return
  }
  func.func @transform_0(%arg0: i32) -> (i32, i32) {
    %c0_i32 = arith.constant 0 : i32
    %c0_i32_0 = arith.constant 0 : i32
    %c0_i32_1 = arith.constant 0 : i32
    return %c0_i32, %c0_i32_0 : i32, i32
  }
  func.func @transform_1(%arg0: i32) -> (i32, i32) {
    %c0_i32 = arith.constant 0 : i32
    %c0_i32_0 = arith.constant 0 : i32
    return %arg0, %c0_i32 : i32, i32
  }
}

</mosaic_0001>

<llo_original>
// kernel: tpu_custom_call.1
$region0: #{tpu_custom_call.1}
  #allocation0 [shape = 'u32[]', space=smem, size = 0x4, offset = 0x4, fixed_abs, tag = 'smem constant byte address 0x4 - core index']
  #allocation1 [shape = 'u32[144,128]{1,0:T(1,128)}', space=vmem, size = 0x12000, scoped, tag = 'internal scratch']
  %s0 = inlined_call_operand.hbm [shape: f32[1,24], index: 0, kind: input, shape index: {}]
  %s1 = inlined_call_operand.vmem [shape: f32[512,24], index: 1, kind: output, shape index: {}]
  %s2 = sld [smem:[#allocation0]]
  $region41: #{tpu_custom_call.1} parent=0
    _
  %s4 = ssub.s32 1, %s2
  %s5 = scalar_select 0, %s4, %s2
  $region1: #{tpu_custom_call.1} parent=0
    #allocation2 [shape = 'u8[512]{0}', space=vmem, size = 0x400, scoped, tag = 'input window, operand 0, single buffered']
    #allocation3 [shape = 's32[2]{0}', space=sflag, size = 0x8, scoped, tag = 'scoped memory for tpu_custom_call.1']
    %6 = vsyncpa [#allocation3], 0
    loop: start=0, step=1, limit=4
    $region2: #{tpu_custom_call.1} parent=1 // loop_pre_header
      _
    $region3: #{tpu_custom_call.1} parent=1 // loop_header
      %s8 = sphi 0, %s12
      %p9 = scmp.ge.s32.totalorder %s8, 4
      %s16 = sphi 0, %s16
      %s18 = sphi 0, %s16
      %s19 = sphi 0, %s18
      %s33 = sphi 0, %s19
      %s39 = sphi 0, %s41
      %s42 = sphi 0, %s39
      %s43 = sphi 0, %s42
      %s59 = sphi 0, %s43
    $region4: #{tpu_custom_call.1} parent=1 // loop_header_branch
      %11 = sbr.rel (%p9) target = $region8
    $region5: #{tpu_custom_call.1} parent=1 // loop_body
      %s13 = ssub.s32 %s8, 1
      %s14 = ssub.s32 %s8, 2
      %s15 = sadd.s32 %s8, 1
      %s17 = sadd.s32 %s16, 1
      %p20 = scmp.eq.s32.totalorder %s8, 1
      %p21 = scmp.ne.s32.totalorder %s16, %s18
      %p22 = scmp.eq.s32.totalorder %s8, 0
      %p23 = por %p21, %p22
      %p24 = scmp.ne.s32.totalorder %s16, %s18
      %p25 = scmp.eq.s32.totalorder %s13, 1
      %p26 = por %p24, %p25
      %p27 = scmp.ne.s32.totalorder %s18, %s19
      %p28 = scmp.eq.s32.totalorder %s13, 0
      %p29 = por %p27, %p28
      %p30 = scmp.ne.s32.totalorder %s18, %s19
      %p31 = scmp.eq.s32.totalorder %s14, 1
      %p32 = por %p30, %p31
      %p34 = scmp.ne.s32.totalorder %s19, %s33
      %p35 = scmp.eq.s32.totalorder %s14, 0
      %p36 = por %p34, %p35
      %s37 = ssub.s32 %s8, %s15
      %p38 = scmp.eq.s32.totalorder %s37, 0
      %s40 = sadd.s32 %s39, 1
      %s41 = scalar_select %p38, %s39, %s40
      %p44 = pneg %p38
      %p45 = scmp.eq.s32.totalorder %s8, 1
      %p46 = por %p44, %p45
      %p47 = scmp.ne.s32.totalorder %s39, %s42
      %p48 = scmp.eq.s32.totalorder %s8, 0
      %p49 = por %p47, %p48
      %p50 = scmp.ne.s32.totalorder %s39, %s42
      %p51 = scmp.eq.s32.totalorder %s13, 1
      %p52 = por %p50, %p51
      %p53 = scmp.ne.s32.totalorder %s42, %s43
      %p54 = scmp.eq.s32.totalorder %s13, 0
      %p55 = por %p53, %p54
      %p56 = scmp.ne.s32.totalorder %s42, %s43
      %p57 = scmp.eq.s32.totalorder %s14, 1
      %p58 = por %p56, %p57
      %p60 = scmp.ne.s32.totalorder %s43, %s59
      %p61 = scmp.eq.s32.totalorder %s14, 0
      %p62 = por %p60, %p61
      %p63 = scmp.le.s32.totalorder 1, %s8
      %p64 = scmp.lt.s32.totalorder %s8, 3
      %p65 = pnand %p63, %p64
      %p66 = pneg %p65
      // Predicated region
      $region9: #{tpu_custom_call.1} parent=5 // pred_check
        _
      $region10: #{tpu_custom_call.1} parent=5 // pred_check_branch
        %68 = sbr.rel (%p65) target = $region12
      $region11: #{tpu_custom_call.1} parent=5 // pred_region
        %s69 = ssub.s32 %s8, 1
        // Predicated region
        $region13: #{tpu_custom_call.1} parent=11 // pred_check
          %p70 = pneg %p29
        $region14: #{tpu_custom_call.1} parent=11 // pred_check_branch
          %72 = sbr.rel (%p70) target = $region16
        $region15: #{tpu_custom_call.1} parent=11 // pred_region
          %s74 = ssub.s32 16, 16
          %75 = vsyncadd [#allocation3], %s74
          %s77 = sshll.u32 [#allocation2], 4
          %s78 = int_to_ptr.vmem [resolvable:$true] %s77
          %80 = dma.hbm_to_vmem [thread:$0]  %s0, 16, %s78, [#allocation3]
        $region16: #{tpu_custom_call.1} parent=11 // pred_fallthru
          _
      $region12: #{tpu_custom_call.1} parent=5 // pred_fallthru
        _
      %p81 = scmp.lt.s32.totalorder %s8, 2
      // Predicated region
      $region17: #{tpu_custom_call.1} parent=5 // pred_check
        %p82 = pneg %p81
      $region18: #{tpu_custom_call.1} parent=5 // pred_check_branch
        %84 = sbr.rel (%p82) target = $region20
      $region19: #{tpu_custom_call.1} parent=5 // pred_region
        _
      $region20: #{tpu_custom_call.1} parent=5 // pred_fallthru
        _
      %p85 = scmp.le.s32.totalorder 1, %s8
      %p86 = scmp.lt.s32.totalorder %s8, 3
      %p87 = pnand %p85, %p86
      %p88 = pneg %p87
      // Predicated region
      $region21: #{tpu_custom_call.1} parent=5 // pred_check
        _
      $region22: #{tpu_custom_call.1} parent=5 // pred_check_branch
        %90 = sbr.rel (%p87) target = $region24
      $region23: #{tpu_custom_call.1} parent=5 // pred_region
        %s91 = ssub.s32 %s8, 1
        // Predicated region
        $region25: #{tpu_custom_call.1} parent=23 // pred_check
          %p92 = pneg %p29
        $region26: #{tpu_custom_call.1} parent=23 // pred_check_branch
          %94 = sbr.rel (%p92) target = $region28
        $region27: #{tpu_custom_call.1} parent=23 // pred_region
          %95 = dma.done [#allocation3], 16
        $region28: #{tpu_custom_call.1} parent=23 // pred_fallthru
          _
        %p96 = pneg %p29
        %p97 = pneg %p26
        %p98 = pneg %p55
        %p99 = pneg %p52
        %s100 = smul.u32 32, %s13
        %p101 = scmp.lt.s32.totalorder %s100, 63
        %s102 = scalar_select %p101, %s100, 63
        %s103 = smul.addr %s102, 8
        %s104 = scalar_lea.vmem %s1, %s103
        %s105 = smul.u32 32, %s13
        %p106 = scmp.lt.s32.totalorder %s105, 63
        %s107 = scalar_select %p106, %s105, 63
        %s108 = smul.addr %s107, 8
        %s109 = scalar_lea.vmem %s1, %s108
        %s110 = smul.u32 32, %s13
        %v111 = vld [vmem:[#allocation2] sm:$0x1]
        %v113 = vlaneseq
        %v114 = vshrl.u32 %v113, 7
        %v115 = vsub.s32 0, %v114
        %v116 = vrot.slane %v111, %v115
        %vm118 = vcmask 195584
        %119 = vst.msk [vmem:[%s109] sm:$0xff] %vm118, %v116
        %120 = vst.msk [vmem:[%s109 + $0x8] sm:$0xff] %vm118, %v116
        %121 = vst.msk [vmem:[%s109 + $0x10] sm:$0xff] %vm118, %v116
        %122 = vst.msk [vmem:[%s109 + $0x18] sm:$0xff] %vm118, %v116
        %123 = vst.msk [vmem:[%s109 + $0x20] sm:$0xff] %vm118, %v116
        %124 = vst.msk [vmem:[%s109 + $0x28] sm:$0xff] %vm118, %v116
        %125 = vst.msk [vmem:[%s109 + $0x30] sm:$0xff] %vm118, %v116
        %126 = vst.msk [vmem:[%s109 + $0x38] sm:$0xff] %vm118, %v116
        %127 = vst.msk [vmem:[%s109 + $0x40] sm:$0xff] %vm118, %v116
        %128 = vst.msk [vmem:[%s109 + $0x48] sm:$0xff] %vm118, %v116
        %129 = vst.msk [vmem:[%s109 + $0x50] sm:$0xff] %vm118, %v116
        %130 = vst.msk [vmem:[%s109 + $0x58] sm:$0xff] %vm118, %v116
        %131 = vst.msk [vmem:[%s109 + $0x60] sm:$0xff] %vm118, %v116
        %132 = vst.msk [vmem:[%s109 + $0x68] sm:$0xff] %vm118, %v116
        %133 = vst.msk [vmem:[%s109 + $0x70] sm:$0xff] %vm118, %v116
        %134 = vst.msk [vmem:[%s109 + $0x78] sm:$0xff] %vm118, %v116
        %135 = vst.msk [vmem:[%s109 + $0x80] sm:$0xff] %vm118, %v116
        %136 = vst.msk [vmem:[%s109 + $0x88] sm:$0xff] %vm118, %v116
        %137 = vst.msk [vmem:[%s109 + $0x90] sm:$0xff] %vm118, %v116
        %138 = vst.msk [vmem:[%s109 + $0x98] sm:$0xff] %vm118, %v116
        %139 = vst.msk [vmem:[%s109 + $0xa0] sm:$0xff] %vm118, %v116
        %140 = vst.msk [vmem:[%s109 + $0xa8] sm:$0xff] %vm118, %v116
        %141 = vst.msk [vmem:[%s109 + $0xb0] sm:$0xff] %vm118, %v116
        %142 = vst.msk [vmem:[%s109 + $0xb8] sm:$0xff] %vm118, %v116
        %143 = vst.msk [vmem:[%s109 + $0xc0] sm:$0xff] %vm118, %v116
        %144 = vst.msk [vmem:[%s109 + $0xc8] sm:$0xff] %vm118, %v116
        %145 = vst.msk [vmem:[%s109 + $0xd0] sm:$0xff] %vm118, %v116
        %146 = vst.msk [vmem:[%s109 + $0xd8] sm:$0xff] %vm118, %v116
        %147 = vst.msk [vmem:[%s109 + $0xe0] sm:$0xff] %vm118, %v116
        %148 = vst.msk [vmem:[%s109 + $0xe8] sm:$0xff] %vm118, %v116
        %149 = vst.msk [vmem:[%s109 + $0xf0] sm:$0xff] %vm118, %v116
        %150 = vst.msk [vmem:[%s109 + $0xf8] sm:$0xff] %vm118, %v116
        %s151 = smul.u32 32, %s13
        %p152 = scmp.lt.s32.totalorder %s151, 63
        %s153 = scalar_select %p152, %s151, 63
        %s154 = smul.addr %s153, 8
        %s155 = scalar_lea.vmem %s1, %s154
        // Predicated region
        $region29: #{tpu_custom_call.1} parent=23 // pred_check
          %p156 = pneg %p52
        $region30: #{tpu_custom_call.1} parent=23 // pred_check_branch
          %158 = sbr.rel (%p156) target = $region32
        $region31: #{tpu_custom_call.1} parent=23 // pred_region
          %s159 = smul.u32 32, %s13
        $region32: #{tpu_custom_call.1} parent=23 // pred_fallthru
          _
      $region24: #{tpu_custom_call.1} parent=5 // pred_fallthru
        _
      %p160 = scmp.le.s32.totalorder 2, %s8
      // Predicated region
      $region33: #{tpu_custom_call.1} parent=5 // pred_check
        %p161 = pneg %p160
      $region34: #{tpu_custom_call.1} parent=5 // pred_check_branch
        %163 = sbr.rel (%p161) target = $region36
      $region35: #{tpu_custom_call.1} parent=5 // pred_region
        %s164 = ssub.s32 %s8, 2
        // Predicated region
        $region37: #{tpu_custom_call.1} parent=35 // pred_check
          %p165 = pneg %p58
        $region38: #{tpu_custom_call.1} parent=35 // pred_check_branch
          %167 = sbr.rel (%p165) target = $region40
        $region39: #{tpu_custom_call.1} parent=35 // pred_region
          %s168 = smul.u32 32, %s14
          %p169 = scmp.lt.s32.totalorder %s168, 63
          %s170 = scalar_select %p169, %s168, 63
          %s171 = smul.addr %s170, 8
          %s172 = scalar_lea.vmem %s1, %s171
        $region40: #{tpu_custom_call.1} parent=35 // pred_fallthru
          _
      $region36: #{tpu_custom_call.1} parent=5 // pred_fallthru
        _
    $region6: #{tpu_custom_call.1} parent=1 // loop_footer
      %s12 = sadd.s32 1, %s8
    $region7: #{tpu_custom_call.1} parent=1 // loop_footer_branch
      %7 = sbr.rel target = $region3
    $region8: #{tpu_custom_call.1} parent=1 // loop_exit
      _
    %173 = vsyncpa [#allocation3], 1
    %s174 = scalar_lea.sflag [#allocation3], 1
    %175 = vsyncpa %s174, 1

</llo_original>
